<compile_context>
chip_gen: v7x
topology: tpu7x:2x2x1
jax: 0.10.0
libtpu: 0.0.40
codegen_flags: <defaults>
</compile_context>

<pallas_src>
import functools
import math

import jax
import jax.numpy as jnp
from jax.experimental import pallas as pl
from jax.experimental.pallas import tpu as pltpu


def _dpp_alterchan_kernel(sub_ref, el_ref, ea_ref, w_ref, o_ref, *, pow_dtype):
    # sub_ref: (4, TM, CP) f32  -- four 2x2 sub-grids, lane-packed channels-last
    # el_ref:  (1, CP)    f32   -- exp(Lambda), tiled across the lane packing
    # ea_ref:  (1, CP)    f32   -- exp(Alpha),  tiled across the lane packing
    # w_ref:   (CP, OPg)  bf16  -- block-diagonal, zero-padded 1x1-conv weight
    # o_ref:   (TM, OPg)  f32
    tm, cp = sub_ref.shape[1], sub_ref.shape[2]

    s0, s1, s2, s3 = sub_ref[0], sub_ref[1], sub_ref[2], sub_ref[3]
    ssum = s0 + s1 + s2 + s3
    m = ssum * 0.25                                   # 2x2 block mean
    ssq = s0 * s0 + s1 * s1 + s2 * s2 + s3 * s3
    # mean((I - m)^2) = mean(I^2) - m^2 = (ssq - ssum*m) / 4   (one-pass variance)
    xn = (ssq - ssum * m) * 0.25 + 0.001
    inv_xn = pl.reciprocal(xn, approx=True)           # EUP vrcp

    # Hoisted broadcasts (JAX does not CSE broadcast_in_dim inside the loop).
    elb = jnp.broadcast_to(el_ref[...], (tm, cp)).astype(pow_dtype)
    eab = jnp.broadcast_to(ea_ref[...], (tm, cp))

    kp = jnp.zeros_like(m)
    iw = jnp.zeros_like(m)
    for a in range(4):
        I = sub_ref[a]
        d = I - m
        x = d * d + 0.001
        ratio = x * inv_xn                            # strictly positive
        # (x/xn) ** exp(Lambda) = exp(exp(Lambda) * log(x/xn)).  On v6e/v7x the
        # log/mul/exp run in bf16 (bf16 EUP path); accumulation stays f32.
        pw = jnp.exp(elb * jnp.log(ratio.astype(pow_dtype))).astype(jnp.float32)
        w = pw + eab
        kp = kp + w
        iw = iw + I * w

    # The 1/4 avgpool factors cancel in Iw / kp.
    dpp = iw * pl.reciprocal(kp, approx=True)         # (TM, CP) f32

    # 1x1 conv as a bf16 MXU matmul with f32 accumulation.
    o_ref[...] = jnp.dot(
        dpp.astype(w_ref.dtype), w_ref[...], preferred_element_type=jnp.float32
    ).astype(o_ref.dtype)


@functools.lru_cache(maxsize=None)
def _bf16_pow_supported():
    """Feature-probe the bf16 log/exp lowering with a tiny kernel (never hard-fail)."""
    try:
        def k(x_ref, o_ref):
            o_ref[...] = jnp.exp(x_ref[...] * jnp.log(x_ref[...]))
        f = pl.pallas_call(k, out_shape=jax.ShapeDtypeStruct((8, 128), jnp.bfloat16))
        jax.block_until_ready(f(jnp.full((8, 128), 2.0, jnp.bfloat16)))
        return True
    except Exception:
        return False


@functools.lru_cache(maxsize=None)
def _tpu_config():
    """Per-generation tuning: VMEM budget / limit, row-tile cap, bf16 EUP pow path."""
    kind = ""
    try:
        kind = jax.devices()[0].device_kind.lower()
    except Exception:
        pass
    if "v7" in kind:   # 64 MiB VMEM per TC (2 TCs); bf16 EUP available
        cfg = dict(vmem_limit=32 << 20, budget=24 << 20, tm_cap=512, bf16_pow=True)
    elif "v6" in kind:  # 128 MiB VMEM; bf16 EUP available
        cfg = dict(vmem_limit=64 << 20, budget=48 << 20, tm_cap=1024, bf16_pow=True)
    elif "v5" in kind:  # 128 MiB VMEM; no bf16 VPU/EUP path -> keep f32 pow
        cfg = dict(vmem_limit=64 << 20, budget=48 << 20, tm_cap=1024, bf16_pow=False)
    else:               # unknown / older: conservative
        cfg = dict(vmem_limit=32 << 20, budget=20 << 20, tm_cap=1024, bf16_pow=False)
    if cfg["bf16_pow"] and not _bf16_pow_supported():
        cfg["bf16_pow"] = False
    return cfg


def _pick_block_rows(m_rows, cp, opg, budget_bytes, tm_cap):
    """Largest 8-aligned packed-row tile whose buffers + temporaries fit the budget."""
    # 2x double-buffered input blocks (4*CP f32), 2x output blocks (OPg f32),
    # ~10 live (TM, CP) f32 temporaries (register/spill headroom).
    bytes_per_row = 4 * (2 * 4 * cp + 2 * opg + 10 * cp)
    fixed = 2 * cp * opg * 2 + 2 * 2 * cp * 4          # bf16 weight + el/ea (2 bufs each)
    avail = max(budget_bytes - fixed, bytes_per_row * 8)
    tm = min(tm_cap, avail // bytes_per_row)
    tm = max(8, (tm // 8) * 8)
    return m_rows if tm >= m_rows else tm


def dpp_alter_chan(x, lam, alpha, conv_w, *, block_rows=None, return_nhwc=False):
    """x: (N, C, H, W) f32 NCHW; conv_w: (O, C, 1, 1); returns (N, O, H//2, W//2)."""
    N, C, H, W = x.shape
    O = conv_w.shape[0]
    Hh, Wh = H // 2, W // 2
    M = N * Hh * Wh

    cfg = _tpu_config()

    # Lane packing: fold g spatial rows into the lane axis so g*C fills 128 lanes.
    g = (128 // C) if (C < 128 and 128 % C == 0) else 1
    # TODO(synk): C < 128 with 128 % C != 0 falls back to g=1 (masked lanes).
    CP = g * C
    q = 128 // math.gcd(g, 128)
    Op = -(-O // q) * q                  # per-group zero-padded output width
    OPg = g * Op                         # packed output lane width (multiple of 128)
    Mp = -(-M // g) * g
    Mg = Mp // g

    # Single layout pass: NCHW -> four 2x2 sub-grids, channels-last, flattened:
    #   subs[2a+b, n*Hh*Wh + i*Wh + j, c] = x[n, c, 2i+a, 2j+b]
    subs = jnp.transpose(
        x.reshape(N, C, Hh, 2, Wh, 2), (3, 5, 0, 2, 4, 1)
    ).reshape(4, M, C).astype(jnp.float32)
    if Mp != M:
        subs = jnp.pad(subs, ((0, 0), (0, Mp - M), (0, 0)))
    subs = subs.reshape(4, Mg, CP)       # contiguous reshape: no extra HBM pass
    # TODO(synk): if the producer supplies NHWC, fold this 2x2 split into the kernel
    # (strided pl.ds selects on a (2*TH, W, C) block) so `subs` never hits HBM.

    # pospowbias constants, pre-exponentiated and tiled across the lane packing.
    el = jnp.tile(jnp.exp(lam.astype(jnp.float32)), g).reshape(1, CP)
    ea = jnp.tile(jnp.exp(alpha.astype(jnp.float32)), g).reshape(1, CP)

    # Block-diagonal, zero-padded 1x1-conv weight, bf16 for the MXU.
    w_core = conv_w.reshape(O, C).T.astype(jnp.float32)             # (C, O)
    w_pad = jnp.zeros((C, Op), jnp.float32).at[:, :O].set(w_core)   # (C, Op)
    wmat = jnp.kron(jnp.eye(g, dtype=jnp.float32), w_pad).astype(jnp.bfloat16)  # (CP, OPg)

    tm = (_pick_block_rows(Mg, CP, OPg, cfg["budget"], cfg["tm_cap"])
          if block_rows is None else max(1, min(block_rows, Mg)))
    grid = (pl.cdiv(Mg, tm),)

    cost = pl.CostEstimate(
        flops=M * 30 * C + 2 * Mg * CP * OPg,
        transcendentals=10 * M * C,
        bytes_accessed=4 * (4 * Mp * C + Mg * OPg) + 2 * CP * OPg,
    )

    kernel = functools.partial(
        _dpp_alterchan_kernel,
        pow_dtype=jnp.bfloat16 if cfg["bf16_pow"] else jnp.float32,
    )

    out = pl.pallas_call(
        kernel,
        out_shape=jax.ShapeDtypeStruct((Mg, OPg), jnp.float32),
        grid=grid,
        in_specs=[
            # TODO(synk): sweep pipeline_mode=pl.Buffered(3) here if profiling shows
            # exposed DMA after the bf16 compute shrinks.
            pl.BlockSpec((4, tm, CP), lambda i: (0, i, 0)),   # packed sub-grids, M-tiled
            pl.BlockSpec((1, CP), lambda i: (0, 0)),          # exp(Lambda) (replicated)
            pl.BlockSpec((1, CP), lambda i: (0, 0)),          # exp(Alpha)  (replicated)
            pl.BlockSpec((CP, OPg), lambda i: (0, 0)),        # conv weight (replicated)
        ],
        out_specs=pl.BlockSpec((tm, OPg), lambda i: (i, 0)),  # lane-dense (OPg % 128 == 0)
        compiler_params=pltpu.CompilerParams(
            dimension_semantics=("parallel",),                # shard rows across TCs (v7x)
            vmem_limit_bytes=cfg["vmem_limit"],
        ),
        cost_estimate=cost,
    )(subs, el, ea, wmat)

    out = out.reshape(Mp, Op)[:M, :O].reshape(N, Hh, Wh, O)
    if return_nhwc:
        return out                       # skip the extra HBM pass when the consumer allows
    return jnp.transpose(out, (0, 3, 1, 2))                   # NCHW for PyTorch parity


def _reference(x, lam, alpha, conv_w):
    """Pure-JAX mirror of the PyTorch forward (for verification)."""
    N, C, H, W = x.shape

    def avgpool(a):
        return a.reshape(N, C, H // 2, 2, W // 2, 2).mean(axis=(3, 5))

    def upsample(a):
        return jnp.repeat(jnp.repeat(a, 2, axis=2), 2, axis=3)

    It = upsample(avgpool(x))
    xx = (x - It) ** 2 + 0.001
    xn = upsample(avgpool(xx))
    el = jnp.exp(lam).reshape(1, C, 1, 1)
    ea = jnp.exp(alpha).reshape(1, C, 1, 1)
    w = (xx / xn) ** el + ea
    kp = avgpool(w)
    Iw = avgpool(x * w)
    dpp = Iw / kp
    return jnp.einsum('oc,ncij->noij', conv_w[:, :, 0, 0], dpp)


if __name__ == "__main__":
    key = jax.random.PRNGKey(0)
    k1, k2, k3, k4 = jax.random.split(key, 4)

    N, C_in, C_out, H, W = 2, 4, 8, 16, 16
    x = jax.random.normal(k1, (N, C_in, H, W), dtype=jnp.float32)
    # pospowbias params: torch.rand -> U[0, 1)
    lam = jax.random.uniform(k2, (C_in,), dtype=jnp.float32)
    alpha = jax.random.uniform(k3, (C_in,), dtype=jnp.float32)
    # 1x1 conv weight, no bias
    conv_w = jax.random.normal(k4, (C_out, C_in, 1, 1), dtype=jnp.float32) * 0.1

    cfg = _tpu_config()                  # resolve generation + bf16 probe outside the trace
    fn = jax.jit(dpp_alter_chan)
    out = jax.block_until_ready(fn(x, lam, alpha, conv_w))
    ref = jax.block_until_ready(_reference(x, lam, alpha, conv_w))

    assert out.shape == (N, C_out, H // 2, W // 2), out.shape
    # Error budget: approx EUP reciprocals (~2^-13) feeding the pow and Iw/kp,
    # bf16 MXU inputs (~2^-9), and on v6e/v7x the bf16 log/exp pow path.
    tol = 2e-2 if cfg["bf16_pow"] else 1e-2
    err = float(jnp.max(jnp.abs(out - ref)))
    assert jnp.allclose(out, ref, rtol=tol, atol=tol), err
    print("KERNEL_OK")
</pallas_src>

<mosaic_0001>
module attributes {stable_mosaic.version = 11 : i64} {
  func.func @_dpp_alterchan_kernel(%arg0: i32, %arg1: memref<4x4x128xf32, #tpu.memory_space<vmem>>, %arg2: memref<1x128xf32, #tpu.memory_space<vmem>>, %arg3: memref<1x128xf32, #tpu.memory_space<vmem>>, %arg4: memref<128x256xbf16, #tpu.memory_space<vmem>>, %arg5: memref<4x256xf32, #tpu.memory_space<vmem>>) attributes {dimension_semantics = [#tpu.dimension_semantics<parallel>], iteration_bounds = array<i64: 1>, scalar_prefetch = 0 : i64, scratch_operands = 0 : i64, tpu.core_type = #tpu.core_type<tc>, window_params = [{transform_indices = @transform_0, window_bounds = array<i64: 4, 4, 128>}, {pipeline_mode = #tpu.pipeline_mode<synchronous>, transform_indices = @transform_1, window_bounds = array<i64: 1, 128>}, {pipeline_mode = #tpu.pipeline_mode<synchronous>, transform_indices = @transform_2, window_bounds = array<i64: 1, 128>}, {pipeline_mode = #tpu.pipeline_mode<synchronous>, transform_indices = @transform_3, window_bounds = array<i64: 128, 256>}, {transform_indices = @transform_4, window_bounds = array<i64: 4, 256>}]} {
    %c0 = arith.constant 0 : index
    %c0_0 = arith.constant 0 : index
    %c0_1 = arith.constant 0 : index
    %0 = vector.load %arg1[%c0, %c0_0, %c0_1] : memref<4x4x128xf32, #tpu.memory_space<vmem>>, vector<1x4x128xf32>
    %1 = vector.shape_cast %0 : vector<1x4x128xf32> to vector<4x128xf32>
    %c1 = arith.constant 1 : index
    %c0_2 = arith.constant 0 : index
    %c0_3 = arith.constant 0 : index
    %2 = vector.load %arg1[%c1, %c0_2, %c0_3] : memref<4x4x128xf32, #tpu.memory_space<vmem>>, vector<1x4x128xf32>
    %3 = vector.shape_cast %2 : vector<1x4x128xf32> to vector<4x128xf32>
    %c2 = arith.constant 2 : index
    %c0_4 = arith.constant 0 : index
    %c0_5 = arith.constant 0 : index
    %4 = vector.load %arg1[%c2, %c0_4, %c0_5] : memref<4x4x128xf32, #tpu.memory_space<vmem>>, vector<1x4x128xf32>
    %5 = vector.shape_cast %4 : vector<1x4x128xf32> to vector<4x128xf32>
    %c3 = arith.constant 3 : index
    %c0_6 = arith.constant 0 : index
    %c0_7 = arith.constant 0 : index
    %6 = vector.load %arg1[%c3, %c0_6, %c0_7] : memref<4x4x128xf32, #tpu.memory_space<vmem>>, vector<1x4x128xf32>
    %7 = vector.shape_cast %6 : vector<1x4x128xf32> to vector<4x128xf32>
    %8 = arith.addf %1, %3 : vector<4x128xf32>
    %9 = arith.addf %8, %5 : vector<4x128xf32>
    %10 = arith.addf %9, %7 : vector<4x128xf32>
    %cst = arith.constant 2.500000e-01 : f32
    %11 = vector.broadcast %cst : f32 to vector<4x128xf32>
    %12 = arith.mulf %10, %11 : vector<4x128xf32>
    %13 = arith.mulf %1, %1 : vector<4x128xf32>
    %14 = arith.mulf %3, %3 : vector<4x128xf32>
    %15 = arith.addf %13, %14 : vector<4x128xf32>
    %16 = arith.mulf %5, %5 : vector<4x128xf32>
    %17 = arith.addf %15, %16 : vector<4x128xf32>
    %18 = arith.mulf %7, %7 : vector<4x128xf32>
    %19 = arith.addf %17, %18 : vector<4x128xf32>
    %20 = arith.mulf %10, %12 : vector<4x128xf32>
    %21 = arith.subf %19, %20 : vector<4x128xf32>
    %cst_8 = arith.constant 2.500000e-01 : f32
    %22 = vector.broadcast %cst_8 : f32 to vector<4x128xf32>
    %23 = arith.mulf %21, %22 : vector<4x128xf32>
    %cst_9 = arith.constant 1.000000e-03 : f32
    %24 = vector.broadcast %cst_9 : f32 to vector<4x128xf32>
    %25 = arith.addf %23, %24 : vector<4x128xf32>
    %26 = tpu.reciprocal %25 {approx = true} : vector<4x128xf32> -> vector<4x128xf32>
    %c0_10 = arith.constant 0 : index
    %c0_11 = arith.constant 0 : index
    %27 = vector.load %arg2[%c0_10, %c0_11] : memref<1x128xf32, #tpu.memory_space<vmem>>, vector<1x128xf32>
    %28 = vector.shape_cast %27 : vector<1x128xf32> to vector<1x128xf32>
    %29 = vector.broadcast %28 : vector<1x128xf32> to vector<4x128xf32>
    %c0_12 = arith.constant 0 : index
    %c0_13 = arith.constant 0 : index
    %30 = vector.load %arg3[%c0_12, %c0_13] : memref<1x128xf32, #tpu.memory_space<vmem>>, vector<1x128xf32>
    %31 = vector.shape_cast %30 : vector<1x128xf32> to vector<1x128xf32>
    %32 = vector.broadcast %31 : vector<1x128xf32> to vector<4x128xf32>
    %cst_14 = arith.constant 0.000000e+00 : f32
    %33 = vector.broadcast %cst_14 : f32 to vector<4x128xf32>
    %cst_15 = arith.constant 0.000000e+00 : f32
    %34 = vector.broadcast %cst_15 : f32 to vector<4x128xf32>
    %c0_16 = arith.constant 0 : index
    %c0_17 = arith.constant 0 : index
    %c0_18 = arith.constant 0 : index
    %35 = vector.load %arg1[%c0_16, %c0_17, %c0_18] : memref<4x4x128xf32, #tpu.memory_space<vmem>>, vector<1x4x128xf32>
    %36 = vector.shape_cast %35 : vector<1x4x128xf32> to vector<4x128xf32>
    %37 = arith.subf %36, %12 : vector<4x128xf32>
    %38 = arith.mulf %37, %37 : vector<4x128xf32>
    %cst_19 = arith.constant 1.000000e-03 : f32
    %39 = vector.broadcast %cst_19 : f32 to vector<4x128xf32>
    %40 = arith.addf %38, %39 : vector<4x128xf32>
    %41 = arith.mulf %40, %26 : vector<4x128xf32>
    %42 = math.log %41 : vector<4x128xf32>
    %43 = arith.mulf %29, %42 : vector<4x128xf32>
    %44 = math.exp %43 : vector<4x128xf32>
    %45 = arith.addf %44, %32 : vector<4x128xf32>
    %46 = arith.addf %33, %45 : vector<4x128xf32>
    %47 = arith.mulf %36, %45 : vector<4x128xf32>
    %48 = arith.addf %34, %47 : vector<4x128xf32>
    %c1_20 = arith.constant 1 : index
    %c0_21 = arith.constant 0 : index
    %c0_22 = arith.constant 0 : index
    %49 = vector.load %arg1[%c1_20, %c0_21, %c0_22] : memref<4x4x128xf32, #tpu.memory_space<vmem>>, vector<1x4x128xf32>
    %50 = vector.shape_cast %49 : vector<1x4x128xf32> to vector<4x128xf32>
    %51 = arith.subf %50, %12 : vector<4x128xf32>
    %52 = arith.mulf %51, %51 : vector<4x128xf32>
    %cst_23 = arith.constant 1.000000e-03 : f32
    %53 = vector.broadcast %cst_23 : f32 to vector<4x128xf32>
    %54 = arith.addf %52, %53 : vector<4x128xf32>
    %55 = arith.mulf %54, %26 : vector<4x128xf32>
    %56 = math.log %55 : vector<4x128xf32>
    %57 = arith.mulf %29, %56 : vector<4x128xf32>
    %58 = math.exp %57 : vector<4x128xf32>
    %59 = arith.addf %58, %32 : vector<4x128xf32>
    %60 = arith.addf %46, %59 : vector<4x128xf32>
    %61 = arith.mulf %50, %59 : vector<4x128xf32>
    %62 = arith.addf %48, %61 : vector<4x128xf32>
    %c2_24 = arith.constant 2 : index
    %c0_25 = arith.constant 0 : index
    %c0_26 = arith.constant 0 : index
    %63 = vector.load %arg1[%c2_24, %c0_25, %c0_26] : memref<4x4x128xf32, #tpu.memory_space<vmem>>, vector<1x4x128xf32>
    %64 = vector.shape_cast %63 : vector<1x4x128xf32> to vector<4x128xf32>
    %65 = arith.subf %64, %12 : vector<4x128xf32>
    %66 = arith.mulf %65, %65 : vector<4x128xf32>
    %cst_27 = arith.constant 1.000000e-03 : f32
    %67 = vector.broadcast %cst_27 : f32 to vector<4x128xf32>
    %68 = arith.addf %66, %67 : vector<4x128xf32>
    %69 = arith.mulf %68, %26 : vector<4x128xf32>
    %70 = math.log %69 : vector<4x128xf32>
    %71 = arith.mulf %29, %70 : vector<4x128xf32>
    %72 = math.exp %71 : vector<4x128xf32>
    %73 = arith.addf %72, %32 : vector<4x128xf32>
    %74 = arith.addf %60, %73 : vector<4x128xf32>
    %75 = arith.mulf %64, %73 : vector<4x128xf32>
    %76 = arith.addf %62, %75 : vector<4x128xf32>
    %c3_28 = arith.constant 3 : index
    %c0_29 = arith.constant 0 : index
    %c0_30 = arith.constant 0 : index
    %77 = vector.load %arg1[%c3_28, %c0_29, %c0_30] : memref<4x4x128xf32, #tpu.memory_space<vmem>>, vector<1x4x128xf32>
    %78 = vector.shape_cast %77 : vector<1x4x128xf32> to vector<4x128xf32>
    %79 = arith.subf %78, %12 : vector<4x128xf32>
    %80 = arith.mulf %79, %79 : vector<4x128xf32>
    %cst_31 = arith.constant 1.000000e-03 : f32
    %81 = vector.broadcast %cst_31 : f32 to vector<4x128xf32>
    %82 = arith.addf %80, %81 : vector<4x128xf32>
    %83 = arith.mulf %82, %26 : vector<4x128xf32>
    %84 = math.log %83 : vector<4x128xf32>
    %85 = arith.mulf %29, %84 : vector<4x128xf32>
    %86 = math.exp %85 : vector<4x128xf32>
    %87 = arith.addf %86, %32 : vector<4x128xf32>
    %88 = arith.addf %74, %87 : vector<4x128xf32>
    %89 = arith.mulf %78, %87 : vector<4x128xf32>
    %90 = arith.addf %76, %89 : vector<4x128xf32>
    %91 = tpu.reciprocal %88 {approx = true} : vector<4x128xf32> -> vector<4x128xf32>
    %92 = arith.mulf %90, %91 : vector<4x128xf32>
    %93 = arith.truncf %92 : vector<4x128xf32> to vector<4x128xbf16>
    %c0_32 = arith.constant 0 : index
    %c0_33 = arith.constant 0 : index
    %94 = vector.load %arg4[%c0_32, %c0_33] : memref<128x256xbf16, #tpu.memory_space<vmem>>, vector<128x256xbf16>
    %cst_34 = arith.constant dense<0.000000e+00> : vector<4x256xf32>
    %95 = tpu.matmul %93, %94, %cst_34 {dimension_numbers = #tpu.dot_dimension_numbers<[1], [0], [0], [1], [0, 0, 1, 1], [], []>} : vector<4x128xbf16>, vector<128x256xbf16>, vector<4x256xf32> -> vector<4x256xf32>
    %c0_35 = arith.constant 0 : index
    %c0_36 = arith.constant 0 : index
    %96 = vector.load %arg5[%c0_35, %c0_36] : memref<4x256xf32, #tpu.memory_space<vmem>>, vector<4x256xf32>
    tpu.vector_store %arg5[%c0_35, %c0_36], %95 {strides = array<i32>} : memref<4x256xf32, #tpu.memory_space<vmem>>, vector<4x256xf32>,
    return
  }
  func.func @transform_0(%arg0: i32) -> (i32, i32, i32) {
    %c0_i32 = arith.constant 0 : i32
    %c0_i32_0 = arith.constant 0 : i32
    %c0_i32_1 = arith.constant 0 : i32
    return %c0_i32, %arg0, %c0_i32_0 : i32, i32, i32
  }
  func.func @transform_1(%arg0: i32) -> (i32, i32) {
    %c0_i32 = arith.constant 0 : i32
    %c0_i32_0 = arith.constant 0 : i32
    %c0_i32_1 = arith.constant 0 : i32
    return %c0_i32, %c0_i32_0 : i32, i32
  }
  func.func @transform_2(%arg0: i32) -> (i32, i32) {
    %c0_i32 = arith.constant 0 : i32
    %c0_i32_0 = arith.constant 0 : i32
    %c0_i32_1 = arith.constant 0 : i32
    return %c0_i32, %c0_i32_0 : i32, i32
  }
  func.func @transform_3(%arg0: i32) -> (i32, i32) {
    %c0_i32 = arith.constant 0 : i32
    %c0_i32_0 = arith.constant 0 : i32
    %c0_i32_1 = arith.constant 0 : i32
    return %c0_i32, %c0_i32_0 : i32, i32
  }
  func.func @transform_4(%arg0: i32) -> (i32, i32) {
    %c0_i32 = arith.constant 0 : i32
    %c0_i32_0 = arith.constant 0 : i32
    return %arg0, %c0_i32 : i32, i32
  }
}

</mosaic_0001>

<llo_original>
// kernel: tile.13
$region0: #{tile.13}
  #allocation0 [shape = 's32[1]{0}', space=sflag, size = 0x4, scoped, tag = 'scoped memory for tile.13']
  %s0 = inlined_call_operand.vmem [shape: f32[4], index: 0, kind: input, shape index: {}]
  %s1 = inlined_call_operand.vmem [shape: f32[32,4], index: 1, kind: output, shape index: {}]
  // Predicated region
  $region2: #{tile.13} parent=0 // pred_check
    _
  $region3: #{tile.13} parent=0 // pred_check_branch
    %3 = sbr.rel (0) target = $region5
  $region4: #{tile.13} parent=0 // pred_region
    _
  $region5: #{tile.13} parent=0 // pred_fallthru
    _
  %v4 = vld [vmem:[%s0] ss:$0 sm:$0xff]
  %5 = vst [vmem:[%s1] sm:$0xff] %v4
  %s6 = scalar_lea.vmem %s1, 8
  %7 = vst [vmem:[%s6] sm:$0xff] %v4
  %s8 = scalar_lea.vmem %s1, 16
  %9 = vst [vmem:[%s8] sm:$0xff] %v4
  %s10 = scalar_lea.vmem %s1, 24
  %11 = vst [vmem:[%s10] sm:$0xff] %v4

// kernel: tile.14
$region0: #{tile.14}
  %s0 = inlined_call_operand.vmem [shape: f32[32,4], index: 0, kind: input, shape index: {}]
  %s1 = inlined_call_operand.vmem [shape: f32[1,128], index: 1, kind: output, shape index: {}]
  $region1: #{tile.14} parent=0
    #allocation0 [shape = 'u8[4096]{0}', space=vmem, size = 0x1000, scoped, tag = 'scoped mem for output reshape']
    %v2 = vld [vmem:[%s0] sm:$0x1]
    %vm3 = vcmask 31744
    %4 = vst.msk [vmem:[#allocation0] sm:$0x1] %vm3, %v2
    %s5 = scalar_lea.vmem %s0, 31
    %v6 = vld [vmem:[%s5] sm:$0x1]
    %7 = vrot.lane.b32.xlu0 %v6, 124
    %v8 = vpop.permute.xlu0 %7
    %vm9 = vcmask 1048544
    %10 = vst.msk [vmem:[#allocation0] sm:$0x1] %vm9, %v8
    %s11 = scalar_lea.vmem %s0, 30
    %v12 = vld [vmem:[%s11] sm:$0x1]
    %13 = vrot.lane.b32.xlu0 %v12, 120
    %v14 = vpop.permute.xlu0 %13
    %vm15 = vcmask 1015744
    %16 = vst.msk [vmem:[#allocation0] sm:$0x1] %vm15, %v14
    %s17 = scalar_lea.vmem %s0, 29
    %v18 = vld [vmem:[%s17] sm:$0x1]
    %19 = vrot.lane.b32.xlu0 %v18, 116
    %v20 = vpop.permute.xlu0 %19
    %vm21 = vcmask 982944
    %22 = vst.msk [vmem:[#allocation0] sm:$0x1] %vm21, %v20
    %s23 = scalar_lea.vmem %s0, 28
    %v24 = vld [vmem:[%s23] sm:$0x1]
    %25 = vrot.lane.b32.xlu0 %v24, 112
    %v26 = vpop.permute.xlu0 %25
    %vm27 = vcmask 950144
    %28 = vst.msk [vmem:[#allocation0] sm:$0x1] %vm27, %v26
    %s29 = scalar_lea.vmem %s0, 27
    %v30 = vld [vmem:[%s29] sm:$0x1]
    %31 = vrot.lane.b32.xlu0 %v30, 108
    %v32 = vpop.permute.xlu0 %31
    %vm33 = vcmask 917344
    %34 = vst.msk [vmem:[#allocation0] sm:$0x1] %vm33, %v32
    %s35 = scalar_lea.vmem %s0, 26
    %v36 = vld [vmem:[%s35] sm:$0x1]
    %37 = vrot.lane.b32.xlu0 %v36, 104
    %v38 = vpop.permute.xlu0 %37
    %vm39 = vcmask 884544
    %40 = vst.msk [vmem:[#allocation0] sm:$0x1] %vm39, %v38
    %s41 = scalar_lea.vmem %s0, 25
    %v42 = vld [vmem:[%s41] sm:$0x1]
    %43 = vrot.lane.b32.xlu0 %v42, 100
    %v44 = vpop.permute.xlu0 %43
    %vm45 = vcmask 851744
    %46 = vst.msk [vmem:[#allocation0] sm:$0x1] %vm45, %v44
    %s47 = scalar_lea.vmem %s0, 24
    %v48 = vld [vmem:[%s47] sm:$0x1]
    %49 = vrot.lane.b32.xlu0 %v48, 96
    %v50 = vpop.permute.xlu0 %49
    %vm51 = vcmask 818944
    %52 = vst.msk [vmem:[#allocation0] sm:$0x1] %vm51, %v50
    %s53 = scalar_lea.vmem %s0, 23
    %v54 = vld [vmem:[%s53] sm:$0x1]
    %55 = vrot.lane.b32.xlu0 %v54, 92
    %v56 = vpop.permute.xlu0 %55
    %vm57 = vcmask 786144
    %58 = vst.msk [vmem:[#allocation0] sm:$0x1] %vm57, %v56
    %s59 = scalar_lea.vmem %s0, 22
    %v60 = vld [vmem:[%s59] sm:$0x1]
    %61 = vrot.lane.b32.xlu0 %v60, 88
    %v62 = vpop.permute.xlu0 %61
    %vm63 = vcmask 753344
    %64 = vst.msk [vmem:[#allocation0] sm:$0x1] %vm63, %v62
    %s65 = scalar_lea.vmem %s0, 21
    %v66 = vld [vmem:[%s65] sm:$0x1]
    %67 = vrot.lane.b32.xlu0 %v66, 84
    %v68 = vpop.permute.xlu0 %67
    %vm69 = vcmask 720544
    %70 = vst.msk [vmem:[#allocation0] sm:$0x1] %vm69, %v68
    %s71 = scalar_lea.vmem %s0, 20
    %v72 = vld [vmem:[%s71] sm:$0x1]
    %73 = vrot.lane.b32.xlu0 %v72, 80
    %v74 = vpop.permute.xlu0 %73
    %vm75 = vcmask 687744
    %76 = vst.msk [vmem:[#allocation0] sm:$0x1] %vm75, %v74
    %s77 = scalar_lea.vmem %s0, 19
    %v78 = vld [vmem:[%s77] sm:$0x1]
    %79 = vrot.lane.b32.xlu0 %v78, 76
    %v80 = vpop.permute.xlu0 %79
    %vm81 = vcmask 654944
    %82 = vst.msk [vmem:[#allocation0] sm:$0x1] %vm81, %v80
    %s83 = scalar_lea.vmem %s0, 18
    %v84 = vld [vmem:[%s83] sm:$0x1]
    %85 = vrot.lane.b32.xlu0 %v84, 72
    %v86 = vpop.permute.xlu0 %85
    %vm87 = vcmask 622144
    %88 = vst.msk [vmem:[#allocation0] sm:$0x1] %vm87, %v86
    %s89 = scalar_lea.vmem %s0, 17
    %v90 = vld [vmem:[%s89] sm:$0x1]
    %91 = vrot.lane.b32.xlu0 %v90, 68
    %v92 = vpop.permute.xlu0 %91
    %vm93 = vcmask 589344
    %94 = vst.msk [vmem:[#allocation0] sm:$0x1] %vm93, %v92
    %s95 = scalar_lea.vmem %s0, 16
    %v96 = vld [vmem:[%s95] sm:$0x1]
    %97 = vrot.lane.b32.xlu0 %v96, 64
    %v98 = vpop.permute.xlu0 %97
    %vm99 = vcmask 556544
    %100 = vst.msk [vmem:[#allocation0] sm:$0x1] %vm99, %v98
    %s101 = scalar_lea.vmem %s0, 15
    %v102 = vld [vmem:[%s101] sm:$0x1]
    %103 = vrot.lane.b32.xlu0 %v102, 60
    %v104 = vpop.permute.xlu0 %103
    %vm105 = vcmask 523744
    %106 = vst.msk [vmem:[#allocation0] sm:$0x1] %vm105, %v104
    %s107 = scalar_lea.vmem %s0, 14
    %v108 = vld [vmem:[%s107] sm:$0x1]
    %109 = vrot.lane.b32.xlu0 %v108, 56
    %v110 = vpop.permute.xlu0 %109
    %vm111 = vcmask 490944
    %112 = vst.msk [vmem:[#allocation0] sm:$0x1] %vm111, %v110
    %s113 = scalar_lea.vmem %s0, 13
    %v114 = vld [vmem:[%s113] sm:$0x1]
    %115 = vrot.lane.b32.xlu0 %v114, 52
    %v116 = vpop.permute.xlu0 %115
    %vm117 = vcmask 458144
    %118 = vst.msk [vmem:[#allocation0] sm:$0x1] %vm117, %v116
    %s119 = scalar_lea.vmem %s0, 12
    %v120 = vld [vmem:[%s119] sm:$0x1]
    %121 = vrot.lane.b32.xlu0 %v120, 48
    %v122 = vpop.permute.xlu0 %121
    %vm123 = vcmask 425344
    %124 = vst.msk [vmem:[#allocation0] sm:$0x1] %vm123, %v122
    %s125 = scalar_lea.vmem %s0, 11
    %v126 = vld [vmem:[%s125] sm:$0x1]
    %127 = vrot.lane.b32.xlu0 %v126, 44
    %v128 = vpop.permute.xlu0 %127
    %vm129 = vcmask 392544
    %130 = vst.msk [vmem:[#allocation0] sm:$0x1] %vm129, %v128
    %s131 = scalar_lea.vmem %s0, 10
    %v132 = vld [vmem:[%s131] sm:$0x1]
    %133 = vrot.lane.b32.xlu0 %v132, 40
    %v134 = vpop.permute.xlu0 %133
    %vm135 = vcmask 359744
    %136 = vst.msk [vmem:[#allocation0] sm:$0x1] %vm135, %v134
    %s137 = scalar_lea.vmem %s0, 9
    %v138 = vld [vmem:[%s137] sm:$0x1]
    %139 = vrot.lane.b32.xlu0 %v138, 36
    %v140 = vpop.permute.xlu0 %139
    %vm141 = vcmask 326944
    %142 = vst.msk [vmem:[#allocation0] sm:$0x1] %vm141, %v140
    %s143 = scalar_lea.vmem %s0, 8
    %v144 = vld [vmem:[%s143] sm:$0x1]
    %145 = vrot.lane.b32.xlu0 %v144, 32
    %v146 = vpop.permute.xlu0 %145
    %vm147 = vcmask 294144
    %148 = vst.msk [vmem:[#allocation0] sm:$0x1] %vm147, %v146
    %s149 = scalar_lea.vmem %s0, 7
    %v150 = vld [vmem:[%s149] sm:$0x1]
    %151 = vrot.lane.b32.xlu0 %v150, 28
    %v152 = vpop.permute.xlu0 %151
    %vm153 = vcmask 261344
    %154 = vst.msk [vmem:[#allocation0] sm:$0x1] %vm153, %v152
    %s155 = scalar_lea.vmem %s0, 6
    %v156 = vld [vmem:[%s155] sm:$0x1]
    %157 = vrot.lane.b32.xlu0 %v156, 24
    %v158 = vpop.permute.xlu0 %157
    %vm159 = vcmask 228544
    %160 = vst.msk [vmem:[#allocation0] sm:$0x1] %vm159, %v158
    %s161 = scalar_lea.vmem %s0, 5
    %v162 = vld [vmem:[%s161] sm:$0x1]
    %163 = vrot.lane.b32.xlu0 %v162, 20
    %v164 = vpop.permute.xlu0 %163
    %vm165 = vcmask 195744
    %166 = vst.msk [vmem:[#allocation0] sm:$0x1] %vm165, %v164
    %s167 = scalar_lea.vmem %s0, 4
    %v168 = vld [vmem:[%s167] sm:$0x1]
    %169 = vrot.lane.b32.xlu0 %v168, 16
    %v170 = vpop.permute.xlu0 %169
    %vm171 = vcmask 162944
    %172 = vst.msk [vmem:[#allocation0] sm:$0x1] %vm171, %v170
    %s173 = scalar_lea.vmem %s0, 3
    %v174 = vld [vmem:[%s173] sm:$0x1]
    %175 = vrot.lane.b32.xlu0 %v174, 12
    %v176 = vpop.permute.xlu0 %175
    %vm177 = vcmask 130144
    %178 = vst.msk [vmem:[#allocation0] sm:$0x1] %vm177, %v176
    %s179 = scalar_lea.vmem %s0, 2
    %v180 = vld [vmem:[%s179] sm:$0x1]
    %181 = vrot.lane.b32.xlu0 %v180, 8
    %v182 = vpop.permute.xlu0 %181
    %vm183 = vcmask 97344
    %184 = vst.msk [vmem:[#allocation0] sm:$0x1] %vm183, %v182
    %s185 = scalar_lea.vmem %s0, 1
    %v186 = vld [vmem:[%s185] sm:$0x1]
    %187 = vrot.lane.b32.xlu0 %v186, 4
    %v188 = vpop.permute.xlu0 %187
    %vm189 = vcmask 64544
    %190 = vst.msk [vmem:[#allocation0] sm:$0x1] %vm189, %v188
    %s192 = sshllo.u32 0, 1
    %v194 = vld [vmem:[#allocation0] sm:%s192]
    %s195 = sshllo.u32 0, 1
    %196 = vst [vmem:[%s1] sm:%s195] %v194

// kernel: dpp_alter_chan.1
$region0: #{dpp_alter_chan.1}
  #allocation0 [shape = 'u32[]', space=smem, size = 0x4, offset = 0x4, fixed_abs, tag = 'smem constant byte address 0x4 - core index']
  #allocation1 [shape = 'u32[144,128]{1,0:T(1,128)}', space=vmem, size = 0x12000, scoped, tag = 'internal scratch']
  %s0 = inlined_call_operand.vmem [shape: f32[4,4,128], index: 0, kind: input, shape index: {}]
  %s1 = inlined_call_operand.vmem [shape: f32[1,128], index: 1, kind: input, shape index: {}]
  %s2 = inlined_call_operand.vmem [shape: f32[1,128], index: 2, kind: input, shape index: {}]
  %s3 = inlined_call_operand.vmem [shape: bf16[128,256], index: 3, kind: input, shape index: {}]
  %s4 = inlined_call_operand.vmem [shape: f32[4,256], index: 4, kind: output, shape index: {}]
  %s5 = sld [smem:[#allocation0]]
  $region26: #{dpp_alter_chan.1} parent=0
    _
  %s7 = ssub.s32 1, %s5
  %s8 = scalar_select 0, %s7, %s5
  // Predicated region
  $region2: #{dpp_alter_chan.1} parent=0 // pred_check
    _
  $region3: #{dpp_alter_chan.1} parent=0 // pred_check_branch
    %10 = sbr.rel (0) target = $region5
  $region4: #{dpp_alter_chan.1} parent=0 // pred_region
    _
  $region5: #{dpp_alter_chan.1} parent=0 // pred_fallthru
    _
  // Predicated region
  $region6: #{dpp_alter_chan.1} parent=0 // pred_check
    _
  $region7: #{dpp_alter_chan.1} parent=0 // pred_check_branch
    %12 = sbr.rel (0) target = $region9
  $region8: #{dpp_alter_chan.1} parent=0 // pred_region
    _
  $region9: #{dpp_alter_chan.1} parent=0 // pred_fallthru
    _
  // Predicated region
  $region10: #{dpp_alter_chan.1} parent=0 // pred_check
    _
  $region11: #{dpp_alter_chan.1} parent=0 // pred_check_branch
    %14 = sbr.rel (0) target = $region13
  $region12: #{dpp_alter_chan.1} parent=0 // pred_region
    _
  $region13: #{dpp_alter_chan.1} parent=0 // pred_fallthru
    _
  // Predicated region
  $region14: #{dpp_alter_chan.1} parent=0 // pred_check
    _
  $region15: #{dpp_alter_chan.1} parent=0 // pred_check_branch
    %16 = sbr.rel (0) target = $region17
  $region16: #{dpp_alter_chan.1} parent=0 // pred_region
    _
  $region17: #{dpp_alter_chan.1} parent=0 // pred_fallthru
    _
  %v18 = vld [vmem:[%s0] sm:$0xf]
  %s19 = scalar_lea.vmem %s0, 4
  %v20 = vld [vmem:[%s19] sm:$0xf]
  %s21 = scalar_lea.vmem %s0, 8
  %v22 = vld [vmem:[%s21] sm:$0xf]
  %s23 = scalar_lea.vmem %s0, 12
  %v24 = vld [vmem:[%s23] sm:$0xf]
  %v25 = vadd.f32 %v18, %v20
  %v26 = vadd.f32 %v25, %v22
  %v27 = vadd.f32 %v26, %v24
  %v28 = vmul.f32 %v27, 0.25
  %v29 = vmul.f32 %v18, %v18
  %v30 = vmul.f32 %v20, %v20
  %v31 = vadd.f32 %v29, %v30
  %v32 = vmul.f32 %v22, %v22
  %v33 = vadd.f32 %v31, %v32
  %v34 = vmul.f32 %v24, %v24
  %v35 = vadd.f32 %v33, %v34
  %v36 = vmul.f32 %v27, %v28
  %v37 = vsub.f32 %v35, %v36
  %v38 = vmul.f32 %v37, 0.25
  %v39 = vadd.f32 %v38, 0.001
  %v40 = vrcp.pop %v39
  %v41 = vld [vmem:[%s1] sm:$0x1]
  %v43 = vlaneseq
  %v44 = vshrl.u32 %v43, 7
  %v45 = vsub.s32 0, %v44
  %v46 = vrot.slane %v41, %v45
  %v48 = vld [vmem:[%s2] sm:$0x1]
  %v50 = vlaneseq
  %v51 = vshrl.u32 %v50, 7
  %v52 = vsub.s32 0, %v51
  %v53 = vrot.slane %v48, %v52
  %v55 = vsub.f32 %v18, %v28
  %v56 = vmul.f32 %v55, %v55
  %v57 = vadd.f32 %v56, 0.001
  %v58 = vmul.f32 %v57, %v40
  %v59 = vlog2.pop %v58
  %v60 = vmul.f32 %v59, 0.6931472
  %v61 = vmul.f32 %v46, %v60
  %v62 = vmul.f32 %v61, 1.442695
  %v63 = vpow.pop %v62
  %v64 = vadd.f32 %v63, %v53
  %v65 = vadd.f32 %v64, 0.0
  %v66 = vmul.f32 %v18, %v64
  %v67 = vadd.f32 %v66, 0.0
  %v68 = vsub.f32 %v20, %v28
  %v69 = vmul.f32 %v68, %v68
  %v70 = vadd.f32 %v69, 0.001
  %v71 = vmul.f32 %v70, %v40
  %v72 = vlog2.pop %v71
  %v73 = vmul.f32 %v72, 0.6931472
  %v74 = vmul.f32 %v46, %v73
  %v75 = vmul.f32 %v74, 1.442695
  %v76 = vpow.pop %v75
  %v77 = vadd.f32 %v76, %v53
  %v78 = vadd.f32 %v65, %v77
  %v79 = vmul.f32 %v20, %v77
  %v80 = vadd.f32 %v67, %v79
  %v81 = vsub.f32 %v22, %v28
  %v82 = vmul.f32 %v81, %v81
  %v83 = vadd.f32 %v82, 0.001
  %v84 = vmul.f32 %v83, %v40
  %v85 = vlog2.pop %v84
  %v86 = vmul.f32 %v85, 0.6931472
  %v87 = vmul.f32 %v46, %v86
  %v88 = vmul.f32 %v87, 1.442695
  %v89 = vpow.pop %v88
  %v90 = vadd.f32 %v89, %v53
  %v91 = vadd.f32 %v78, %v90
  %v92 = vmul.f32 %v22, %v90
  %v93 = vadd.f32 %v80, %v92
  %v94 = vsub.f32 %v24, %v28
  %v95 = vmul.f32 %v94, %v94
  %v96 = vadd.f32 %v95, 0.001
  %v97 = vmul.f32 %v96, %v40
  %v98 = vlog2.pop %v97
  %v99 = vmul.f32 %v98, 0.6931472
  %v100 = vmul.f32 %v46, %v99
  %v101 = vmul.f32 %v100, 1.442695
  %v102 = vpow.pop %v101
  %v103 = vadd.f32 %v102, %v53
  %v104 = vadd.f32 %v91, %v103
  %v105 = vmul.f32 %v24, %v103
  %v106 = vadd.f32 %v93, %v105
  %v107 = vrcp.pop %v104
  %v108 = vmul.f32 %v106, %v107
  %v109 = vpack.c.bf16 %v108, %v108
  %v110 = vld [vmem:[%s3] sm:$0xff]
  %v111 = vld [vmem:[%s3 + $0x8] sm:$0xff]
  %v112 = vld [vmem:[%s3 + $0x10] sm:$0xff]
  %v113 = vld [vmem:[%s3 + $0x18] sm:$0xff]
  %v114 = vld [vmem:[%s3 + $0x20] sm:$0xff]
  %v115 = vld [vmem:[%s3 + $0x28] sm:$0xff]
  %v116 = vld [vmem:[%s3 + $0x30] sm:$0xff]
  %v117 = vld [vmem:[%s3 + $0x38] sm:$0xff]
  %v118 = vld [vmem:[%s3 + $0x40] sm:$0xff]
  %v119 = vld [vmem:[%s3 + $0x48] sm:$0xff]
  %v120 = vld [vmem:[%s3 + $0x50] sm:$0xff]
  %v121 = vld [vmem:[%s3 + $0x58] sm:$0xff]
  %v122 = vld [vmem:[%s3 + $0x60] sm:$0xff]
  %v123 = vld [vmem:[%s3 + $0x68] sm:$0xff]
  %v124 = vld [vmem:[%s3 + $0x70] sm:$0xff]
  %v125 = vld [vmem:[%s3 + $0x78] sm:$0xff]
  %v142 = vunpack.c.l.b16 %v110
  %v143 = vunpack.c.h.b16 %v110
  %v144 = vunpack.c.l.b16 %v111
  %v145 = vunpack.c.h.b16 %v111
  %v146 = vunpack.c.l.b16 %v112
  %v147 = vunpack.c.h.b16 %v112
  %v148 = vunpack.c.l.b16 %v113
  %v149 = vunpack.c.h.b16 %v113
  %v150 = vunpack.c.l.b16 %v114
  %v151 = vunpack.c.h.b16 %v114
  %v152 = vunpack.c.l.b16 %v115
  %v153 = vunpack.c.h.b16 %v115
  %v154 = vunpack.c.l.b16 %v116
  %v155 = vunpack.c.h.b16 %v116
  %v156 = vunpack.c.l.b16 %v117
  %v157 = vunpack.c.h.b16 %v117
  %v158 = vunpack.c.l.b16 %v118
  %v159 = vunpack.c.h.b16 %v118
  %v160 = vunpack.c.l.b16 %v119
  %v161 = vunpack.c.h.b16 %v119
  %v162 = vunpack.c.l.b16 %v120
  %v163 = vunpack.c.h.b16 %v120
  %v164 = vunpack.c.l.b16 %v121
  %v165 = vunpack.c.h.b16 %v121
  %v166 = vunpack.c.l.b16 %v122
  %v167 = vunpack.c.h.b16 %v122
  %v168 = vunpack.c.l.b16 %v123
  %v169 = vunpack.c.h.b16 %v123
  %v170 = vunpack.c.l.b16 %v124
  %v171 = vunpack.c.h.b16 %v124
  %v172 = vunpack.c.l.b16 %v125
  %v173 = vunpack.c.h.b16 %v125
  %v174 = vpack.c.b16 %v144, %v142
  %v175 = vpack.c.b16 %v145, %v143
  %v176 = vpack.c.b16 %v148, %v146
  %v177 = vpack.c.b16 %v149, %v147
  %v178 = vpack.c.b16 %v152, %v150
  %v179 = vpack.c.b16 %v153, %v151
  %v180 = vpack.c.b16 %v156, %v154
  %v181 = vpack.c.b16 %v157, %v155
  %v182 = vpack.c.b16 %v160, %v158
  %v183 = vpack.c.b16 %v161, %v159
  %v184 = vpack.c.b16 %v164, %v162
  %v185 = vpack.c.b16 %v165, %v163
  %v186 = vpack.c.b16 %v168, %v166
  %v187 = vpack.c.b16 %v169, %v167
  %v188 = vpack.c.b16 %v172, %v170
  %v189 = vpack.c.b16 %v173, %v171
  %206 = vmatprep.subr.bf16.mxu0 %v175
  %207 = vmatpush1.bf16.msra.mxu0 %v174
  %208 = vmatprep.subr.bf16.mxu0 %v177
  %209 = vmatpush1.bf16.msra.mxu0 %v176
  %210 = vmatprep.subr.bf16.mxu0 %v179
  %211 = vmatpush1.bf16.msra.mxu0 %v178
  %212 = vmatprep.subr.bf16.mxu0 %v181
  %213 = vmatpush1.bf16.msra.mxu0 %v180
  %214 = vmatprep.subr.bf16.mxu0 %v183
  %215 = vmatpush1.bf16.msra.mxu0 %v182
  %216 = vmatprep.subr.bf16.mxu0 %v185
  %217 = vmatpush1.bf16.msra.mxu0 %v184
  %218 = vmatprep.subr.bf16.mxu0 %v187
  %219 = vmatpush1.bf16.msra.mxu0 %v186
  %220 = vmatprep.subr.bf16.mxu0 %v189
  %221 = vmatpush1.bf16.msra.mxu0 %v188
  %222 = vmatprep.subr.bf16.mxu0 0
  %223 = vmatpush1.bf16.msra.mxu0 0
  %224 = vmatprep.subr.bf16.mxu0 0
  %225 = vmatpush1.bf16.msra.mxu0 0
  %226 = vmatprep.subr.bf16.mxu0 0
  %227 = vmatpush1.bf16.msra.mxu0 0
  %228 = vmatprep.subr.bf16.mxu0 0
  %229 = vmatpush1.bf16.msra.mxu0 0
  %230 = vmatprep.subr.bf16.mxu0 0
  %231 = vmatpush1.bf16.msra.mxu0 0
  %232 = vmatprep.subr.bf16.mxu0 0
  %233 = vmatpush1.bf16.msra.mxu0 0
  %234 = vmatprep.subr.bf16.mxu0 0
  %235 = vmatpush1.bf16.msra.mxu0 0
  %236 = vmatprep.subr.bf16.mxu0 0
  %237 = vmatpush1.bf16.msra.mxu0 0
  %238 = vmatprep.mubr.bf16.mxu0 0
  %239 = vmatmul.mubr.bf16.gmra.mrb[0].mxu0 %v109
  %v240 = vpop.f32.mrb[0].mxu0
  %v241 = vadd.f32 0.0, %v240
  %v242 = vpop.f32.mrb[0].mxu0
  %v243 = vadd.f32 0.0, %v242
  %v244 = vpop.f32.mrb[0].mxu0
  %v245 = vpop.f32.mrb[0].mxu0
  %246 = vdwg.mxu0
  %v249 = vcombine.low %v241, %v243
  %251 = vst [vmem:[%s4] sm:$0xff] %v249
  // Predicated region
  $region18: #{dpp_alter_chan.1} parent=0 // pred_check
    _
  $region19: #{dpp_alter_chan.1} parent=0 // pred_check_branch
    %253 = sbr.rel (0) target = $region21
  $region20: #{dpp_alter_chan.1} parent=0 // pred_region
    _
  $region21: #{dpp_alter_chan.1} parent=0 // pred_fallthru
    _
  // Predicated region
  $region22: #{dpp_alter_chan.1} parent=0 // pred_check
    _
  $region23: #{dpp_alter_chan.1} parent=0 // pred_check_branch
    %255 = sbr.rel (0) target = $region25
  $region24: #{dpp_alter_chan.1} parent=0 // pred_region
    _
  $region25: #{dpp_alter_chan.1} parent=0 // pred_fallthru
    _

</llo_original>
